<compile_context>
chip_gen: v7x
topology: tpu7x:2x2x1
jax: 0.10.0
libtpu: 0.0.40
codegen_flags: <defaults>
</compile_context>

<pallas_src>
import jax
import jax.numpy as jnp
from jax.experimental import pallas as pl
from jax.experimental.pallas import tpu as pltpu


def transition_kernel(x_ref, scale_ref, bias_ref, w_ref, o_ref):
    # x_ref:     (4, C, PT)   four 2x2 pooling offsets of one pixel tile
    # scale_ref: (C, 1)       folded BN scale  = gamma / sqrt(var + eps)
    # bias_ref:  (C, 1)       folded BN bias   = beta - mean * scale
    # w_ref:     (Cout, C)    1x1 conv weight
    # o_ref:     (Cout, PT)
    s = scale_ref[...]
    b = bias_ref[...]
    # BN + ReLU per offset, then the 2x2 average pool as a sum of the four offsets
    # (pure VPU work — no pooling matrix, no extra MXU FLOPs).
    acc = jnp.maximum(x_ref[0] * s + b, 0.0)
    for k in range(1, 4):                       # static unroll
        acc = acc + jnp.maximum(x_ref[k] * s + b, 0.0)
    pooled = acc * 0.25                         # (C, PT)
    # 1x1 conv on the pooled activations (4x fewer MXU FLOPs than conv-then-pool).
    # NOTE: for realistic DenseNet widths (C, Cout >= 128) cast w/pooled to bf16 here
    # (keeping preferred_element_type=f32); fp32 is kept for the tiny demo sizes,
    # where on v5e an unrolled VPU FMA over C would also be a valid alternative.
    o_ref[...] = jnp.dot(w_ref[...], pooled,
                         preferred_element_type=jnp.float32).astype(o_ref.dtype)


def _pick_pixel_tile(n_pixels, c_in, c_out, budget_bytes=12 * 1024 * 1024):
    """Largest 128-aligned pixel tile whose double-buffered working set fits VMEM."""
    per_pixel = 4 * (2 * 4 * c_in + 2 * c_out)   # fp32: 2x(4,C,PT) in + 2x(Cout,PT) out
    tile = max(128, (budget_bytes // per_pixel) // 128 * 128)
    return n_pixels if n_pixels <= tile else tile


def transition_forward(x_nchw, gamma, beta, running_mean, running_var, conv_w, eps=1e-5):
    """x_nchw: (N, C, H, W) float32; conv_w: (Cout, C, 1, 1). Returns NCHW output."""
    N, C, H, W = x_nchw.shape
    Cout = conv_w.shape[0]
    Hp, Wp = H // 2, W // 2
    P = N * Hp * Wp                               # flattened output-pixel axis (lanes)

    # ---- glue (plain JAX): fold BN, split the four 2x2 pooling offsets ----
    scale = (gamma / jnp.sqrt(running_var + eps)).astype(jnp.float32)    # (C,)
    bias = (beta - running_mean * scale).astype(jnp.float32)             # (C,)
    # x4[k, c, p] = x[n, c, 2i+di, 2j+dj],  k = 2*di+dj,  p = (n*Hp+i)*Wp + j
    x4 = jnp.transpose(
        x_nchw.reshape(N, C, Hp, 2, Wp, 2), (3, 5, 1, 0, 2, 4)
    ).reshape(4, C, P).astype(jnp.float32)
    w2d = conv_w.reshape(Cout, C).astype(jnp.float32)                    # (Cout, C)

    PT = _pick_pixel_tile(P, C, Cout)
    grid = (pl.cdiv(P, PT),)

    flops = 2 * Cout * C * P + 16 * C * P          # conv + BN/ReLU/pool elementwise
    bytes_accessed = (x4.size + Cout * P + 2 * C + Cout * C) * 4

    out2 = pl.pallas_call(
        transition_kernel,
        out_shape=jax.ShapeDtypeStruct((Cout, P), jnp.float32),
        grid=grid,
        in_specs=[
            pl.BlockSpec((4, C, PT), lambda j: (0, 0, j)),   # activations (pixel tile)
            pl.BlockSpec((C, 1), lambda j: (0, 0)),          # BN scale (grid-invariant)
            pl.BlockSpec((C, 1), lambda j: (0, 0)),          # BN bias
            pl.BlockSpec((Cout, C), lambda j: (0, 0)),       # conv weight
        ],
        out_specs=pl.BlockSpec((Cout, PT), lambda j: (0, j)),
        compiler_params=pltpu.CompilerParams(
            dimension_semantics=("parallel",),
            vmem_limit_bytes=48 * 1024 * 1024,
        ),
        cost_estimate=pl.CostEstimate(
            flops=int(flops), transcendentals=0, bytes_accessed=int(bytes_accessed)),
    )(x4, scale.reshape(C, 1), bias.reshape(C, 1), w2d)

    # (Cout, N*Hp*Wp) -> (N, Cout, Hp, Wp)
    return jnp.transpose(out2.reshape(Cout, N, Hp, Wp), (1, 0, 2, 3))


def transition_reference(x_nchw, gamma, beta, running_mean, running_var, conv_w, eps=1e-5):
    """Pure-JAX reference matching PyTorch eval-mode semantics (conv then pool)."""
    N, C, H, W = x_nchw.shape
    Cout = conv_w.shape[0]
    scale = gamma / jnp.sqrt(running_var + eps)
    bias = beta - running_mean * scale
    y = jnp.maximum(x_nchw * scale[None, :, None, None] + bias[None, :, None, None], 0.0)
    z = jnp.einsum('nchw,oc->nohw', y, conv_w.reshape(Cout, C))
    return z.reshape(N, Cout, H // 2, 2, W // 2, 2).mean(axis=(3, 5))


if __name__ == "__main__":
    # Module config: Transition(n_channels=4, n_out_channels=2)
    N, C, H, W = 2, 4, 16, 16
    Cout = 2

    key = jax.random.PRNGKey(0)
    kx, kg, kb, km, kv, kw = jax.random.split(key, 6)

    x = jax.random.normal(kx, (N, C, H, W), jnp.float32)
    gamma = 0.5 + jax.random.uniform(kg, (C,), jnp.float32)          # BN weight
    beta = 0.1 * jax.random.normal(kb, (C,), jnp.float32)            # BN bias
    running_mean = 0.1 * jax.random.normal(km, (C,), jnp.float32)
    running_var = 0.5 + jax.random.uniform(kv, (C,), jnp.float32)
    conv_w = jax.random.normal(kw, (Cout, C, 1, 1), jnp.float32) * (1.0 / jnp.sqrt(C))

    out = transition_forward(x, gamma, beta, running_mean, running_var, conv_w)
    out = jax.block_until_ready(out)

    ref = transition_reference(x, gamma, beta, running_mean, running_var, conv_w)
    assert out.shape == (N, Cout, H // 2, W // 2), out.shape
    assert jnp.allclose(out, ref, atol=1e-5, rtol=1e-5), float(jnp.max(jnp.abs(out - ref)))

    print("KERNEL_OK")
</pallas_src>

<mosaic_0001>
module attributes {stable_mosaic.version = 11 : i64} {
  func.func @transition_kernel(%arg0: i32, %arg1: memref<4x4x128xf32, #tpu.memory_space<vmem>>, %arg2: memref<4x1xf32, #tpu.memory_space<vmem>>, %arg3: memref<4x1xf32, #tpu.memory_space<vmem>>, %arg4: memref<2x4xf32, #tpu.memory_space<vmem>>, %arg5: memref<2x128xf32, #tpu.memory_space<vmem>>) attributes {dimension_semantics = [#tpu.dimension_semantics<parallel>], iteration_bounds = array<i64: 1>, scalar_prefetch = 0 : i64, scratch_operands = 0 : i64, tpu.core_type = #tpu.core_type<tc>, window_params = [{transform_indices = @transform_0, window_bounds = array<i64: 4, 4, 128>}, {pipeline_mode = #tpu.pipeline_mode<synchronous>, transform_indices = @transform_1, window_bounds = array<i64: 4, 1>}, {pipeline_mode = #tpu.pipeline_mode<synchronous>, transform_indices = @transform_2, window_bounds = array<i64: 4, 1>}, {pipeline_mode = #tpu.pipeline_mode<synchronous>, transform_indices = @transform_3, window_bounds = array<i64: 2, 4>}, {transform_indices = @transform_4, window_bounds = array<i64: 2, 128>}]} {
    %c0 = arith.constant 0 : index
    %c0_0 = arith.constant 0 : index
    %0 = vector.load %arg2[%c0, %c0_0] : memref<4x1xf32, #tpu.memory_space<vmem>>, vector<4x1xf32>
    %c0_1 = arith.constant 0 : index
    %c0_2 = arith.constant 0 : index
    %1 = vector.load %arg3[%c0_1, %c0_2] : memref<4x1xf32, #tpu.memory_space<vmem>>, vector<4x1xf32>
    %c0_3 = arith.constant 0 : index
    %c0_4 = arith.constant 0 : index
    %c0_5 = arith.constant 0 : index
    %2 = vector.load %arg1[%c0_3, %c0_4, %c0_5] : memref<4x4x128xf32, #tpu.memory_space<vmem>>, vector<1x4x128xf32>
    %3 = vector.shape_cast %2 : vector<1x4x128xf32> to vector<4x128xf32>
    %4 = vector.broadcast %0 : vector<4x1xf32> to vector<4x128xf32>
    %5 = arith.mulf %3, %4 : vector<4x128xf32>
    %6 = vector.broadcast %1 : vector<4x1xf32> to vector<4x128xf32>
    %7 = arith.addf %5, %6 : vector<4x128xf32>
    %cst = arith.constant 0.000000e+00 : f32
    %8 = vector.broadcast %cst : f32 to vector<4x128xf32>
    %9 = arith.maximumf %7, %8 : vector<4x128xf32>
    %c1 = arith.constant 1 : index
    %c0_6 = arith.constant 0 : index
    %c0_7 = arith.constant 0 : index
    %10 = vector.load %arg1[%c1, %c0_6, %c0_7] : memref<4x4x128xf32, #tpu.memory_space<vmem>>, vector<1x4x128xf32>
    %11 = vector.shape_cast %10 : vector<1x4x128xf32> to vector<4x128xf32>
    %12 = vector.broadcast %0 : vector<4x1xf32> to vector<4x128xf32>
    %13 = arith.mulf %11, %12 : vector<4x128xf32>
    %14 = vector.broadcast %1 : vector<4x1xf32> to vector<4x128xf32>
    %15 = arith.addf %13, %14 : vector<4x128xf32>
    %cst_8 = arith.constant 0.000000e+00 : f32
    %16 = vector.broadcast %cst_8 : f32 to vector<4x128xf32>
    %17 = arith.maximumf %15, %16 : vector<4x128xf32>
    %18 = arith.addf %9, %17 : vector<4x128xf32>
    %c2 = arith.constant 2 : index
    %c0_9 = arith.constant 0 : index
    %c0_10 = arith.constant 0 : index
    %19 = vector.load %arg1[%c2, %c0_9, %c0_10] : memref<4x4x128xf32, #tpu.memory_space<vmem>>, vector<1x4x128xf32>
    %20 = vector.shape_cast %19 : vector<1x4x128xf32> to vector<4x128xf32>
    %21 = vector.broadcast %0 : vector<4x1xf32> to vector<4x128xf32>
    %22 = arith.mulf %20, %21 : vector<4x128xf32>
    %23 = vector.broadcast %1 : vector<4x1xf32> to vector<4x128xf32>
    %24 = arith.addf %22, %23 : vector<4x128xf32>
    %cst_11 = arith.constant 0.000000e+00 : f32
    %25 = vector.broadcast %cst_11 : f32 to vector<4x128xf32>
    %26 = arith.maximumf %24, %25 : vector<4x128xf32>
    %27 = arith.addf %18, %26 : vector<4x128xf32>
    %c3 = arith.constant 3 : index
    %c0_12 = arith.constant 0 : index
    %c0_13 = arith.constant 0 : index
    %28 = vector.load %arg1[%c3, %c0_12, %c0_13] : memref<4x4x128xf32, #tpu.memory_space<vmem>>, vector<1x4x128xf32>
    %29 = vector.shape_cast %28 : vector<1x4x128xf32> to vector<4x128xf32>
    %30 = vector.broadcast %0 : vector<4x1xf32> to vector<4x128xf32>
    %31 = arith.mulf %29, %30 : vector<4x128xf32>
    %32 = vector.broadcast %1 : vector<4x1xf32> to vector<4x128xf32>
    %33 = arith.addf %31, %32 : vector<4x128xf32>
    %cst_14 = arith.constant 0.000000e+00 : f32
    %34 = vector.broadcast %cst_14 : f32 to vector<4x128xf32>
    %35 = arith.maximumf %33, %34 : vector<4x128xf32>
    %36 = arith.addf %27, %35 : vector<4x128xf32>
    %cst_15 = arith.constant 2.500000e-01 : f32
    %37 = vector.broadcast %cst_15 : f32 to vector<4x128xf32>
    %38 = arith.mulf %36, %37 : vector<4x128xf32>
    %c0_16 = arith.constant 0 : index
    %c0_17 = arith.constant 0 : index
    %39 = vector.load %arg4[%c0_16, %c0_17] : memref<2x4xf32, #tpu.memory_space<vmem>>, vector<2x4xf32>
    %cst_18 = arith.constant dense<0.000000e+00> : vector<2x128xf32>
    %40 = tpu.matmul %39, %38, %cst_18 {dimension_numbers = #tpu.dot_dimension_numbers<[1], [0], [0], [1], [0, 0, 1, 1], [], []>} : vector<2x4xf32>, vector<4x128xf32>, vector<2x128xf32> -> vector<2x128xf32>
    %c0_19 = arith.constant 0 : index
    %c0_20 = arith.constant 0 : index
    %41 = vector.load %arg5[%c0_19, %c0_20] : memref<2x128xf32, #tpu.memory_space<vmem>>, vector<2x128xf32>
    tpu.vector_store %arg5[%c0_19, %c0_20], %40 {strides = array<i32>} : memref<2x128xf32, #tpu.memory_space<vmem>>, vector<2x128xf32>,
    return
  }
  func.func @transform_0(%arg0: i32) -> (i32, i32, i32) {
    %c0_i32 = arith.constant 0 : i32
    %c0_i32_0 = arith.constant 0 : i32
    %c0_i32_1 = arith.constant 0 : i32
    return %c0_i32, %c0_i32_0, %arg0 : i32, i32, i32
  }
  func.func @transform_1(%arg0: i32) -> (i32, i32) {
    %c0_i32 = arith.constant 0 : i32
    %c0_i32_0 = arith.constant 0 : i32
    %c0_i32_1 = arith.constant 0 : i32
    return %c0_i32, %c0_i32_0 : i32, i32
  }
  func.func @transform_2(%arg0: i32) -> (i32, i32) {
    %c0_i32 = arith.constant 0 : i32
    %c0_i32_0 = arith.constant 0 : i32
    %c0_i32_1 = arith.constant 0 : i32
    return %c0_i32, %c0_i32_0 : i32, i32
  }
  func.func @transform_3(%arg0: i32) -> (i32, i32) {
    %c0_i32 = arith.constant 0 : i32
    %c0_i32_0 = arith.constant 0 : i32
    %c0_i32_1 = arith.constant 0 : i32
    return %c0_i32, %c0_i32_0 : i32, i32
  }
  func.func @transform_4(%arg0: i32) -> (i32, i32) {
    %c0_i32 = arith.constant 0 : i32
    %c0_i32_0 = arith.constant 0 : i32
    return %c0_i32, %arg0 : i32, i32
  }
}

</mosaic_0001>

<llo_original>
// kernel: tpu_custom_call.1
$region0: #{tpu_custom_call.1}
  #allocation0 [shape = 'u32[]', space=smem, size = 0x4, offset = 0x4, fixed_abs, tag = 'smem constant byte address 0x4 - core index']
  #allocation1 [shape = 'u32[144,128]{1,0:T(1,128)}', space=vmem, size = 0x12000, scoped, tag = 'internal scratch']
  %s0 = inlined_call_operand.hbm [shape: f32[4,4,128], index: 0, kind: input, shape index: {}]
  %s1 = inlined_call_operand.vmem [shape: f32[4,1], index: 1, kind: input, shape index: {}]
  %s2 = inlined_call_operand.vmem [shape: f32[4,1], index: 2, kind: input, shape index: {}]
  %s3 = inlined_call_operand.vmem [shape: f32[2,4], index: 3, kind: input, shape index: {}]
  %s4 = inlined_call_operand.hbm [shape: f32[2,128], index: 4, kind: output, shape index: {}]
  %s5 = sld [smem:[#allocation0]]
  $region30: #{tpu_custom_call.1} parent=0
    _
  %s7 = ssub.s32 1, %s5
  %s8 = scalar_select 0, %s7, %s5
  $region1: #{tpu_custom_call.1} parent=0
    #allocation2 [shape = 'u8[8192]{0}', space=vmem, size = 0x2000, scoped, tag = 'input window, operand 0, single buffered']
    #allocation3 [shape = 's32[1]{0}', space=sflag, size = 0x4, scoped, tag = 'scoped memory for tpu_custom_call.1']
    #allocation4 [shape = 's32[1]{0}', space=sflag, size = 0x4, scoped, tag = 'scoped memory for tpu_custom_call.1']
    #allocation5 [shape = 'u8[1024]{0}', space=vmem, size = 0x400, scoped, tag = 'output window, operand 0, single buffered']
    %9 = vsyncpa [#allocation3], 0
    %10 = vsyncpa [#allocation4], 0
    // Predicated region
    $region2: #{tpu_custom_call.1} parent=1 // pred_check
      _
    $region3: #{tpu_custom_call.1} parent=1 // pred_check_branch
      %12 = sbr.rel (0) target = $region5
    $region4: #{tpu_custom_call.1} parent=1 // pred_region
      %s14 = ssub.s32 256, 256
      %15 = vsyncadd [#allocation3], %s14
      %s16 = sshll.u32 [#allocation2], 4
      %s17 = int_to_ptr.vmem [resolvable:$true] %s16
      %22 = dma.hbm_to_vmem [thread:$0]  %s0, 256, %s17, [#allocation3], 64, 64, 4
    $region5: #{tpu_custom_call.1} parent=1 // pred_fallthru
      _
    // Predicated region
    $region6: #{tpu_custom_call.1} parent=1 // pred_check
      _
    $region7: #{tpu_custom_call.1} parent=1 // pred_check_branch
      %24 = sbr.rel (0) target = $region9
    $region8: #{tpu_custom_call.1} parent=1 // pred_region
      _
    $region9: #{tpu_custom_call.1} parent=1 // pred_fallthru
      _
    // Predicated region
    $region10: #{tpu_custom_call.1} parent=1 // pred_check
      _
    $region11: #{tpu_custom_call.1} parent=1 // pred_check_branch
      %26 = sbr.rel (0) target = $region13
    $region12: #{tpu_custom_call.1} parent=1 // pred_region
      _
    $region13: #{tpu_custom_call.1} parent=1 // pred_fallthru
      _
    // Predicated region
    $region14: #{tpu_custom_call.1} parent=1 // pred_check
      _
    $region15: #{tpu_custom_call.1} parent=1 // pred_check_branch
      %28 = sbr.rel (0) target = $region17
    $region16: #{tpu_custom_call.1} parent=1 // pred_region
      _
    $region17: #{tpu_custom_call.1} parent=1 // pred_fallthru
      _
    // Predicated region
    $region18: #{tpu_custom_call.1} parent=1 // pred_check
      _
    $region19: #{tpu_custom_call.1} parent=1 // pred_check_branch
      %30 = sbr.rel (0) target = $region21
    $region20: #{tpu_custom_call.1} parent=1 // pred_region
      %31 = dma.done [#allocation3], 256
    $region21: #{tpu_custom_call.1} parent=1 // pred_fallthru
      _
    %v32 = vld [vmem:[%s1] sm:$0xf]
    %v33 = vld [vmem:[%s2] sm:$0xf]
    %v34 = vld [vmem:[#allocation2] sm:$0xf]
    %36 = vset.pattern.permute.xlu0 0
    %37 = vperm.xlu0 %36, %v32
    %v38 = vpop.permute.xlu0 %37
    %v40 = vmul.f32 %v34, %v38
    %42 = vset.pattern.permute.xlu0 0
    %43 = vperm.xlu0 %42, %v33
    %v44 = vpop.permute.xlu0 %43
    %v46 = vadd.f32 %v40, %v44
    %v47 = vmax.f32 %v46, 0.0
    %s48 = scalar_lea.vmem [#allocation2], 4
    %v49 = vld [vmem:[%s48] sm:$0xf]
    %v50 = vmul.f32 %v49, %v38
    %v51 = vadd.f32 %v50, %v44
    %v52 = vmax.f32 %v51, 0.0
    %v53 = vadd.f32 %v47, %v52
    %s54 = scalar_lea.vmem [#allocation2], 8
    %v55 = vld [vmem:[%s54] sm:$0xf]
    %v56 = vmul.f32 %v55, %v38
    %v57 = vadd.f32 %v56, %v44
    %v58 = vmax.f32 %v57, 0.0
    %v59 = vadd.f32 %v53, %v58
    %s60 = scalar_lea.vmem [#allocation2], 12
    %v61 = vld [vmem:[%s60] sm:$0xf]
    %v62 = vmul.f32 %v61, %v38
    %v63 = vadd.f32 %v62, %v44
    %v64 = vmax.f32 %v63, 0.0
    %v65 = vadd.f32 %v59, %v64
    %v66 = vmul.f32 %v65, 0.25
    %v67 = vld [vmem:[%s3] sm:$0x3]
    %vm68 = vcmask 31744
    %v70 = vsel %vm68, %v67, 0
    %vm72 = vcmask 1043456
    %v74 = vsel %vm72, %v66, 0
    %76 = vmatprep.subr.mxu0 0.0
    %77 = vmatpush1.msra.mxu0 %v74
    %78 = vmatprep.subr.mxu0 0.0
    %79 = vmatpush1.msra.mxu0 0.0
    %80 = vmatprep.subr.mxu0 0.0
    %81 = vmatpush1.msra.mxu0 0.0
    %82 = vmatprep.subr.mxu0 0.0
    %83 = vmatpush1.msra.mxu0 0.0
    %84 = vmatprep.subr.mxu0 0.0
    %85 = vmatpush1.msra.mxu0 0.0
    %86 = vmatprep.subr.mxu0 0.0
    %87 = vmatpush1.msra.mxu0 0.0
    %88 = vmatprep.subr.mxu0 0.0
    %89 = vmatpush1.msra.mxu0 0.0
    %90 = vmatprep.subr.mxu0 0.0
    %91 = vmatpush1.msra.mxu0 0.0
    %92 = vmatprep.subr.mxu0 0.0
    %93 = vmatpush1.msra.mxu0 0.0
    %94 = vmatprep.subr.mxu0 0.0
    %95 = vmatpush1.msra.mxu0 0.0
    %96 = vmatprep.subr.mxu0 0.0
    %97 = vmatpush1.msra.mxu0 0.0
    %98 = vmatprep.subr.mxu0 0.0
    %99 = vmatpush1.msra.mxu0 0.0
    %100 = vmatprep.subr.mxu0 0.0
    %101 = vmatpush1.msra.mxu0 0.0
    %102 = vmatprep.subr.mxu0 0.0
    %103 = vmatpush1.msra.mxu0 0.0
    %104 = vmatprep.subr.mxu0 0.0
    %105 = vmatpush1.msra.mxu0 0.0
    %106 = vmatprep.subr.mxu0 0.0
    %107 = vmatpush1.msra.mxu0 0.0
    %108 = vmatprep.subr.mxu0 0.0
    %109 = vmatpush1.msra.mxu0 0.0
    %110 = vmatprep.subr.mxu0 0.0
    %111 = vmatpush1.msra.mxu0 0.0
    %112 = vmatprep.subr.mxu0 0.0
    %113 = vmatpush1.msra.mxu0 0.0
    %114 = vmatprep.subr.mxu0 0.0
    %115 = vmatpush1.msra.mxu0 0.0
    %116 = vmatprep.subr.mxu0 0.0
    %117 = vmatpush1.msra.mxu0 0.0
    %118 = vmatprep.subr.mxu0 0.0
    %119 = vmatpush1.msra.mxu0 0.0
    %120 = vmatprep.subr.mxu0 0.0
    %121 = vmatpush1.msra.mxu0 0.0
    %122 = vmatprep.subr.mxu0 0.0
    %123 = vmatpush1.msra.mxu0 0.0
    %124 = vmatprep.subr.mxu0 0.0
    %125 = vmatpush1.msra.mxu0 0.0
    %126 = vmatprep.subr.mxu0 0.0
    %127 = vmatpush1.msra.mxu0 0.0
    %128 = vmatprep.subr.mxu0 0.0
    %129 = vmatpush1.msra.mxu0 0.0
    %130 = vmatprep.subr.mxu0 0.0
    %131 = vmatpush1.msra.mxu0 0.0
    %132 = vmatprep.subr.mxu0 0.0
    %133 = vmatpush1.msra.mxu0 0.0
    %134 = vmatprep.subr.mxu0 0.0
    %135 = vmatpush1.msra.mxu0 0.0
    %136 = vmatprep.subr.mxu0 0.0
    %137 = vmatpush1.msra.mxu0 0.0
    %138 = vmatprep.subr.mxu0 0.0
    %139 = vmatpush1.msra.mxu0 0.0
    %140 = vmatprep.mubr.f32.mxu0 0.0
    %141 = vmatmul.mubr.f32.gmra.mrb[0].mxu0 %v70
    %v142 = vpop.f32.mrb[0].mxu0
    %v143 = vadd.f32 0.0, %v142
    %v144 = vpop.f32.mrb[0].mxu0
    %145 = vdwg.mxu0
    %146 = vst [vmem:[#allocation5] sm:$0x3] %v143
    // Predicated region
    $region22: #{tpu_custom_call.1} parent=1 // pred_check
      _
    $region23: #{tpu_custom_call.1} parent=1 // pred_check_branch
      %148 = sbr.rel (0) target = $region25
    $region24: #{tpu_custom_call.1} parent=1 // pred_region
      %s150 = ssub.s32 32, 32
      %151 = vsyncadd [#allocation4], %s150
      %s153 = sshll.u32 [#allocation5], 4
      %s154 = int_to_ptr.vmem [resolvable:$true] %s153
      %156 = dma.vmem_to_hbm [thread:$0]  %s154, 32, %s4, [#allocation4]
    $region25: #{tpu_custom_call.1} parent=1 // pred_fallthru
      _
    // Predicated region
    $region26: #{tpu_custom_call.1} parent=1 // pred_check
      _
    $region27: #{tpu_custom_call.1} parent=1 // pred_check_branch
      %158 = sbr.rel (0) target = $region29
    $region28: #{tpu_custom_call.1} parent=1 // pred_region
      %159 = dma.done [#allocation4], 32
    $region29: #{tpu_custom_call.1} parent=1 // pred_fallthru
      _
    %160 = vsyncpa [#allocation3], 1
    %161 = vsyncpa [#allocation4], 1

</llo_original>
